<compile_context>
chip_gen: v7x
topology: tpu7x:2x2x1
jax: 0.10.0
libtpu: 0.0.40
codegen_flags: <defaults>
</compile_context>

<pallas_src>
import functools

import jax
import jax.numpy as jnp
from jax.experimental import pallas as pl
from jax.experimental.pallas import tpu as pltpu

NUM_STAGES = 5
FEAT_C = 576          # mobilenet_v3_small final feature channels
HID1 = 256
HID2 = 128
HEAD_OUT = 1 + NUM_STAGES + 1   # days(1) | stage(5) | health(1) = 7
HEAD_PAD = 128                  # pad fused head output to a full lane width

_WEIGHT_BYTES = (FEAT_C * HID1 + HID1 + HID1 * HID2 + HID2
                 + HID2 * HEAD_PAD + HEAD_PAD) * 4


def _round_up(n, m):
    return ((n + m - 1) // m) * m


def _hardswish(x):
    # torch.nn.Hardswish: x * relu6(x + 3) / 6
    return x * jnp.clip(x + 3.0, 0.0, 6.0) * (1.0 / 6.0)


def _vmem_capacity_bytes():
    try:
        return int(pltpu.get_tpu_info().vmem_capacity_bytes)
    except Exception:
        return 64 * 1024 * 1024   # conservative: v7x per-TensorCore VMEM


def fuse_head_params(params):
    """Fold the 3 head Linears into one lane-padded (128,128) matmul + (1,128) bias.

    Call ONCE when params are built; keeps the concat/pad out of the per-call
    jit path (it is also applied lazily inside lettuce_heads as a fallback).
    """
    if "w_head" in params:
        return params
    w_head = jnp.concatenate([params["wd"], params["ws"], params["wh"]], axis=1)  # (128, 7)
    w_head = jnp.pad(w_head, ((0, 0), (0, HEAD_PAD - HEAD_OUT)))                  # (128, 128)
    b_head = jnp.concatenate([params["bd"], params["bs"], params["bh"]], axis=1)  # (1, 7)
    b_head = jnp.pad(b_head, ((0, 0), (0, HEAD_PAD - HEAD_OUT)))                  # (1, 128)
    fused = dict(params)
    fused["w_head"] = w_head
    fused["b_head"] = b_head
    return fused


def _lettuce_head_kernel(x_ref, w1_ref, b1_ref, w2_ref, b2_ref,
                         wh_ref, bh_ref, out_ref):
    # x tile: (bb, H*W, C).  avgpool(AdaptiveAvgPool2d(1)) + flatten:
    # sum over H*W with f32 accumulation (bf16 input upcast per-slab inside the
    # reduction; no explicit full-tile astype copy), then a static 1/HW scale.
    inv_hw = 1.0 / float(x_ref.shape[1])
    pooled = jnp.sum(x_ref[...], axis=1, dtype=jnp.float32) * inv_hw      # (bb, C)

    # classifier: Linear(576,256) -> Hardswish -> Dropout(0.2)[identity]
    #             Linear(256,128) -> Hardswish -> Dropout(0.1)[identity]
    h = jnp.dot(pooled, w1_ref[...], preferred_element_type=jnp.float32) + b1_ref[...]
    h = _hardswish(h)
    h = jnp.dot(h, w2_ref[...], preferred_element_type=jnp.float32) + b2_ref[...]
    feats = _hardswish(h)                                                 # (bb, 128)

    # fused heads: one lane-dense (bb, 128) matmul; cols 0=days, 1..5=stage,
    # 6=health (sigmoid), 7..127 = zero padding.
    out = jnp.dot(feats, wh_ref[...], preferred_element_type=jnp.float32) + bh_ref[...]
    col = jax.lax.broadcasted_iota(jnp.int32, out.shape, 1)
    out_ref[...] = jnp.where(col == (1 + NUM_STAGES), jax.nn.sigmoid(out), out)


@functools.partial(jax.jit, static_argnames=("block_b",))
def lettuce_heads(feat_map, params, *, block_b=None):
    """feat_map: (B, H, W, C=576) NHWC -> (days (B,1), stage (B,5), health (B,1)).

    The kernel streams feat_map in whatever dtype it arrives in (f32 or bf16;
    accumulation is always f32).  For best performance have the backbone emit
    bfloat16 — casting here would only add an extra HBM pass, so it is not done.

    block_b=None auto-sizes the batch tile from VMEM capacity; an explicit
    int overrides it (still clamped so B>8 gives a >=2-step grid for v7x).
    """
    B, H, W, C = feat_map.shape
    assert C == FEAT_C
    HW = H * W
    x = feat_map.reshape(B, HW, C)          # zero-copy merge of H, W

    params = fuse_head_params(params)       # no-op when pre-fused outside jit

    itemsize = jnp.dtype(x.dtype).itemsize
    sub = 8 * max(1, 4 // itemsize)                 # sublane packing multiple (f32:8, bf16:16)
    hw_pad = _round_up(HW, sub)                     # VMEM tile pads HW up to sublane multiple
    row_in = hw_pad * C * itemsize                  # bytes per batch row, one input buffer
    row_f32 = hw_pad * C * 4                        # worst-case f32 reduce temp per row
    row_out = HEAD_PAD * 4
    fixed = 2 * _WEIGHT_BYTES + 4 * 1024 * 1024     # double-buffered weights + margin

    if block_b is None:
        budget = int(0.8 * _vmem_capacity_bytes()) - fixed
        bb = max(8, min(512, (budget // (2 * row_in + row_f32 + 2 * row_out)) // 8 * 8))
    else:
        bb = int(block_b)

    if B <= 8:
        bb = B                               # one tiny tile; block dim == full array dim
    else:
        bb = max(8, min(bb, B))
        bb = min(bb, pl.cdiv(B, 2))          # >= 2 grid steps so both v7x TCs get work
        bb = _round_up(bb, 8)

    # Ragged last block (grid = ceil(B/bb)): Pallas clips the partial block,
    # so no jnp.pad copy of the full feature map is ever materialized in HBM.
    grid = (pl.cdiv(B, bb),)

    vmem_limit = max(2 * bb * row_in + bb * row_f32 + 2 * bb * row_out + fixed,
                     32 * 1024 * 1024)

    cost = pl.CostEstimate(
        flops=2 * B * (HW * C + C * HID1 + HID1 * HID2 + HID2 * HEAD_PAD),
        transcendentals=B * HEAD_PAD,
        bytes_accessed=B * HW * C * itemsize + _WEIGHT_BYTES + B * HEAD_PAD * 4,
    )

    fused = pl.pallas_call(
        _lettuce_head_kernel,
        out_shape=jax.ShapeDtypeStruct((B, HEAD_PAD), jnp.float32),
        grid_spec=pltpu.PrefetchScalarGridSpec(
            num_scalar_prefetch=0,
            grid=grid,
            in_specs=[
                pl.BlockSpec((bb, HW, C), lambda i: (i, 0, 0)),      # x tile (double-buffered)
                # Constant index_map -> weights are DMA'd once and stay resident.
                pl.BlockSpec((FEAT_C, HID1), lambda i: (0, 0)),      # w1
                pl.BlockSpec((1, HID1), lambda i: (0, 0)),           # b1
                pl.BlockSpec((HID1, HID2), lambda i: (0, 0)),        # w2
                pl.BlockSpec((1, HID2), lambda i: (0, 0)),           # b2
                pl.BlockSpec((HID2, HEAD_PAD), lambda i: (0, 0)),    # fused head W
                pl.BlockSpec((1, HEAD_PAD), lambda i: (0, 0)),       # fused head b
            ],
            out_specs=pl.BlockSpec((bb, HEAD_PAD), lambda i: (i, 0)),
        ),
        compiler_params=pltpu.CompilerParams(
            dimension_semantics=("parallel",),
            vmem_limit_bytes=int(vmem_limit),
        ),
        cost_estimate=cost,
    )(x, params["w1"], params["b1"], params["w2"], params["b2"],
      params["w_head"], params["b_head"])

    days = fused[:, 0:1]
    stage = fused[:, 1:1 + NUM_STAGES]
    health = fused[:, 1 + NUM_STAGES:1 + NUM_STAGES + 1]
    return days, stage, health


def _reference(feat_map, params):
    pooled = feat_map.astype(jnp.float32).mean(axis=(1, 2))
    h = _hardswish(pooled @ params["w1"] + params["b1"])
    f = _hardswish(h @ params["w2"] + params["b2"])
    days = f @ params["wd"] + params["bd"]
    stage = f @ params["ws"] + params["bs"]
    health = jax.nn.sigmoid(f @ params["wh"] + params["bh"])
    return days, stage, health


def _init_params(key):
    ks = jax.random.split(key, 10)
    n = lambda k, shape, s=0.05: s * jax.random.normal(k, shape, dtype=jnp.float32)
    return {
        "w1": n(ks[0], (FEAT_C, HID1)), "b1": n(ks[1], (1, HID1)),
        "w2": n(ks[2], (HID1, HID2)),   "b2": n(ks[3], (1, HID2)),
        "wd": n(ks[4], (HID2, 1)),      "bd": n(ks[5], (1, 1)),
        "ws": n(ks[6], (HID2, NUM_STAGES)), "bs": n(ks[7], (1, NUM_STAGES)),
        "wh": n(ks[8], (HID2, 1)),      "bh": n(ks[9], (1, 1)),
    }


def _check(feat, params, atol=1e-4, rtol=1e-4, **kw):
    days, stage, health = jax.block_until_ready(lettuce_heads(feat, params, **kw))
    r_days, r_stage, r_health = _reference(feat, params)
    B = feat.shape[0]
    assert days.shape == (B, 1) and stage.shape == (B, NUM_STAGES) and health.shape == (B, 1)
    assert jnp.allclose(days, r_days, atol=atol, rtol=rtol), "days mismatch"
    assert jnp.allclose(stage, r_stage, atol=atol, rtol=rtol), "stage mismatch"
    assert jnp.allclose(health, r_health, atol=atol, rtol=rtol), "health mismatch"


if __name__ == "__main__":
    root = jax.random.PRNGKey(0)
    k_params, k_feat, k_feat2 = jax.random.split(root, 3)
    # head-weight fusion hoisted out of the per-call jit path
    params = fuse_head_params(_init_params(k_params))

    # Small, deterministic stand-in for the backbone's output feature map:
    # batch=2, 7x7 spatial, 576 channels (NHWC).
    feat = jax.random.normal(k_feat, (2, 7, 7, FEAT_C), dtype=jnp.float32)
    _check(feat, params)                                   # tiny batch, single tile

    # Ragged multi-tile batch grid (B=20): no jnp.pad copy of the input.
    feat_big = jax.random.normal(k_feat2, (20, 7, 7, FEAT_C), dtype=jnp.float32)
    _check(feat_big, params, block_b=8)                    # explicit tile, grid=(3,), ragged tail
    _check(feat_big, params)                               # auto tile, >=2 grid steps (v7x TCs)

    # bf16 feature stream (what the backbone should emit on v6e/v7x):
    # halves HBM traffic; accumulation stays f32 inside the kernel.
    _check(feat_big.astype(jnp.bfloat16), params, atol=2e-3, rtol=2e-2)

    print("KERNEL_OK")
</pallas_src>

<mosaic_0001>
module attributes {stable_mosaic.version = 11 : i64} {
  func.func @_lettuce_head_kernel(%arg0: i32, %arg1: memref<2x49x576xf32, #tpu.memory_space<vmem>>, %arg2: memref<576x256xf32, #tpu.memory_space<vmem>>, %arg3: memref<1x256xf32, #tpu.memory_space<vmem>>, %arg4: memref<256x128xf32, #tpu.memory_space<vmem>>, %arg5: memref<1x128xf32, #tpu.memory_space<vmem>>, %arg6: memref<128x128xf32, #tpu.memory_space<vmem>>, %arg7: memref<1x128xf32, #tpu.memory_space<vmem>>, %arg8: memref<2x128xf32, #tpu.memory_space<vmem>>) attributes {dimension_semantics = [#tpu.dimension_semantics<parallel>], iteration_bounds = array<i64: 1>, scalar_prefetch = 0 : i64, scratch_operands = 0 : i64, tpu.core_type = #tpu.core_type<tc>, window_params = [{transform_indices = @transform_0, window_bounds = array<i64: 2, 49, 576>}, {pipeline_mode = #tpu.pipeline_mode<synchronous>, transform_indices = @transform_1, window_bounds = array<i64: 576, 256>}, {pipeline_mode = #tpu.pipeline_mode<synchronous>, transform_indices = @transform_2, window_bounds = array<i64: 1, 256>}, {pipeline_mode = #tpu.pipeline_mode<synchronous>, transform_indices = @transform_3, window_bounds = array<i64: 256, 128>}, {pipeline_mode = #tpu.pipeline_mode<synchronous>, transform_indices = @transform_4, window_bounds = array<i64: 1, 128>}, {pipeline_mode = #tpu.pipeline_mode<synchronous>, transform_indices = @transform_5, window_bounds = array<i64: 128, 128>}, {pipeline_mode = #tpu.pipeline_mode<synchronous>, transform_indices = @transform_6, window_bounds = array<i64: 1, 128>}, {transform_indices = @transform_7, window_bounds = array<i64: 2, 128>}]} {
    %c0 = arith.constant 0 : index
    %c0_0 = arith.constant 0 : index
    %c0_1 = arith.constant 0 : index
    %0 = vector.load %arg1[%c0, %c0_0, %c0_1] : memref<2x49x576xf32, #tpu.memory_space<vmem>>, vector<2x49x576xf32>
    %cst = arith.constant dense<0.000000e+00> : vector<2x576xf32>
    %1 = vector.multi_reduction <add>, %0, %cst [1] : vector<2x49x576xf32> to vector<2x576xf32>
    %cst_2 = arith.constant 0.0204081628 : f32
    %2 = vector.broadcast %cst_2 : f32 to vector<2x576xf32>
    %3 = arith.mulf %1, %2 : vector<2x576xf32>
    %c0_3 = arith.constant 0 : index
    %c0_4 = arith.constant 0 : index
    %4 = vector.load %arg2[%c0_3, %c0_4] : memref<576x256xf32, #tpu.memory_space<vmem>>, vector<576x256xf32>
    %cst_5 = arith.constant dense<0.000000e+00> : vector<2x256xf32>
    %5 = tpu.matmul %3, %4, %cst_5 {dimension_numbers = #tpu.dot_dimension_numbers<[1], [0], [0], [1], [0, 0, 1, 1], [], []>} : vector<2x576xf32>, vector<576x256xf32>, vector<2x256xf32> -> vector<2x256xf32>
    %c0_6 = arith.constant 0 : index
    %c0_7 = arith.constant 0 : index
    %6 = vector.load %arg3[%c0_6, %c0_7] : memref<1x256xf32, #tpu.memory_space<vmem>>, vector<1x256xf32>
    %7 = vector.broadcast %6 : vector<1x256xf32> to vector<2x256xf32>
    %8 = arith.addf %5, %7 : vector<2x256xf32>
    %cst_8 = arith.constant 3.000000e+00 : f32
    %9 = vector.broadcast %cst_8 : f32 to vector<2x256xf32>
    %10 = arith.addf %8, %9 : vector<2x256xf32>
    %cst_9 = arith.constant 0.000000e+00 : f32
    %cst_10 = arith.constant 6.000000e+00 : f32
    %11 = vector.broadcast %cst_9 : f32 to vector<2x256xf32>
    %12 = arith.maximumf %11, %10 : vector<2x256xf32>
    %13 = vector.broadcast %cst_10 : f32 to vector<2x256xf32>
    %14 = arith.minimumf %13, %12 : vector<2x256xf32>
    %15 = arith.mulf %8, %14 : vector<2x256xf32>
    %cst_11 = arith.constant 0.166666672 : f32
    %16 = vector.broadcast %cst_11 : f32 to vector<2x256xf32>
    %17 = arith.mulf %15, %16 : vector<2x256xf32>
    %c0_12 = arith.constant 0 : index
    %c0_13 = arith.constant 0 : index
    %18 = vector.load %arg4[%c0_12, %c0_13] : memref<256x128xf32, #tpu.memory_space<vmem>>, vector<256x128xf32>
    %cst_14 = arith.constant dense<0.000000e+00> : vector<2x128xf32>
    %19 = tpu.matmul %17, %18, %cst_14 {dimension_numbers = #tpu.dot_dimension_numbers<[1], [0], [0], [1], [0, 0, 1, 1], [], []>} : vector<2x256xf32>, vector<256x128xf32>, vector<2x128xf32> -> vector<2x128xf32>
    %c0_15 = arith.constant 0 : index
    %c0_16 = arith.constant 0 : index
    %20 = vector.load %arg5[%c0_15, %c0_16] : memref<1x128xf32, #tpu.memory_space<vmem>>, vector<1x128xf32>
    %21 = vector.broadcast %20 : vector<1x128xf32> to vector<2x128xf32>
    %22 = arith.addf %19, %21 : vector<2x128xf32>
    %cst_17 = arith.constant 3.000000e+00 : f32
    %23 = vector.broadcast %cst_17 : f32 to vector<2x128xf32>
    %24 = arith.addf %22, %23 : vector<2x128xf32>
    %cst_18 = arith.constant 0.000000e+00 : f32
    %cst_19 = arith.constant 6.000000e+00 : f32
    %25 = vector.broadcast %cst_18 : f32 to vector<2x128xf32>
    %26 = arith.maximumf %25, %24 : vector<2x128xf32>
    %27 = vector.broadcast %cst_19 : f32 to vector<2x128xf32>
    %28 = arith.minimumf %27, %26 : vector<2x128xf32>
    %29 = arith.mulf %22, %28 : vector<2x128xf32>
    %cst_20 = arith.constant 0.166666672 : f32
    %30 = vector.broadcast %cst_20 : f32 to vector<2x128xf32>
    %31 = arith.mulf %29, %30 : vector<2x128xf32>
    %c0_21 = arith.constant 0 : index
    %c0_22 = arith.constant 0 : index
    %32 = vector.load %arg6[%c0_21, %c0_22] : memref<128x128xf32, #tpu.memory_space<vmem>>, vector<128x128xf32>
    %cst_23 = arith.constant dense<0.000000e+00> : vector<2x128xf32>
    %33 = tpu.matmul %31, %32, %cst_23 {dimension_numbers = #tpu.dot_dimension_numbers<[1], [0], [0], [1], [0, 0, 1, 1], [], []>} : vector<2x128xf32>, vector<128x128xf32>, vector<2x128xf32> -> vector<2x128xf32>
    %c0_24 = arith.constant 0 : index
    %c0_25 = arith.constant 0 : index
    %34 = vector.load %arg7[%c0_24, %c0_25] : memref<1x128xf32, #tpu.memory_space<vmem>>, vector<1x128xf32>
    %35 = vector.broadcast %34 : vector<1x128xf32> to vector<2x128xf32>
    %36 = arith.addf %33, %35 : vector<2x128xf32>
    %37 = tpu.iota {dimensions = array<i32: 1>} : vector<2x128xi32>
    %c6_i32 = arith.constant 6 : i32
    %38 = vector.broadcast %c6_i32 : i32 to vector<2x128xi32>
    %39 = arith.cmpi eq, %37, %38 : vector<2x128xi32>
    %40 = arith.negf %36 : vector<2x128xf32>
    %41 = math.exp %40 : vector<2x128xf32>
    %cst_26 = arith.constant 1.000000e+00 : f32
    %42 = vector.broadcast %cst_26 : f32 to vector<2x128xf32>
    %43 = arith.addf %42, %41 : vector<2x128xf32>
    %44 = arith.divf %42, %43 : vector<2x128xf32>
    %45 = arith.select %39, %44, %36 : vector<2x128xi1>, vector<2x128xf32>
    %c0_27 = arith.constant 0 : index
    %c0_28 = arith.constant 0 : index
    %46 = vector.load %arg8[%c0_27, %c0_28] : memref<2x128xf32, #tpu.memory_space<vmem>>, vector<2x128xf32>
    tpu.vector_store %arg8[%c0_27, %c0_28], %45 {strides = array<i32>} : memref<2x128xf32, #tpu.memory_space<vmem>>, vector<2x128xf32>,
    return
  }
  func.func @transform_0(%arg0: i32) -> (i32, i32, i32) {
    %c0_i32 = arith.constant 0 : i32
    %c0_i32_0 = arith.constant 0 : i32
    %c0_i32_1 = arith.constant 0 : i32
    return %arg0, %c0_i32, %c0_i32_0 : i32, i32, i32
  }
  func.func @transform_1(%arg0: i32) -> (i32, i32) {
    %c0_i32 = arith.constant 0 : i32
    %c0_i32_0 = arith.constant 0 : i32
    %c0_i32_1 = arith.constant 0 : i32
    return %c0_i32, %c0_i32_0 : i32, i32
  }
  func.func @transform_2(%arg0: i32) -> (i32, i32) {
    %c0_i32 = arith.constant 0 : i32
    %c0_i32_0 = arith.constant 0 : i32
    %c0_i32_1 = arith.constant 0 : i32
    return %c0_i32, %c0_i32_0 : i32, i32
  }
  func.func @transform_3(%arg0: i32) -> (i32, i32) {
    %c0_i32 = arith.constant 0 : i32
    %c0_i32_0 = arith.constant 0 : i32
    %c0_i32_1 = arith.constant 0 : i32
    return %c0_i32, %c0_i32_0 : i32, i32
  }
  func.func @transform_4(%arg0: i32) -> (i32, i32) {
    %c0_i32 = arith.constant 0 : i32
    %c0_i32_0 = arith.constant 0 : i32
    %c0_i32_1 = arith.constant 0 : i32
    return %c0_i32, %c0_i32_0 : i32, i32
  }
  func.func @transform_5(%arg0: i32) -> (i32, i32) {
    %c0_i32 = arith.constant 0 : i32
    %c0_i32_0 = arith.constant 0 : i32
    %c0_i32_1 = arith.constant 0 : i32
    return %c0_i32, %c0_i32_0 : i32, i32
  }
  func.func @transform_6(%arg0: i32) -> (i32, i32) {
    %c0_i32 = arith.constant 0 : i32
    %c0_i32_0 = arith.constant 0 : i32
    %c0_i32_1 = arith.constant 0 : i32
    return %c0_i32, %c0_i32_0 : i32, i32
  }
  func.func @transform_7(%arg0: i32) -> (i32, i32) {
    %c0_i32 = arith.constant 0 : i32
    %c0_i32_0 = arith.constant 0 : i32
    return %arg0, %c0_i32 : i32, i32
  }
}

</mosaic_0001>

<llo_original>
// kernel: lettuce_heads.1
$region0: #{lettuce_heads.1}
  #allocation0 [shape = 'u32[]', space=smem, size = 0x4, offset = 0x4, fixed_abs, tag = 'smem constant byte address 0x4 - core index']
  #allocation1 [shape = 'u32[144,128]{1,0:T(1,128)}', space=vmem, size = 0x12000, scoped, tag = 'internal scratch']
  %s0 = inlined_call_operand.vmem [shape: f32[2,49,576], index: 0, kind: input, shape index: {}]
  %s1 = inlined_call_operand.hbm [shape: f32[576,256], index: 1, kind: input, shape index: {}]
  %s2 = inlined_call_operand.vmem [shape: f32[1,256], index: 2, kind: input, shape index: {}]
  %s3 = inlined_call_operand.vmem [shape: f32[256,128], index: 3, kind: input, shape index: {}]
  %s4 = inlined_call_operand.vmem [shape: f32[1,128], index: 4, kind: input, shape index: {}]
  %s5 = inlined_call_operand.vmem [shape: f32[128,128], index: 5, kind: input, shape index: {}]
  %s6 = inlined_call_operand.vmem [shape: f32[1,128], index: 6, kind: input, shape index: {}]
  %s7 = inlined_call_operand.vmem [shape: f32[2,128], index: 7, kind: output, shape index: {}]
  %s8 = sld [smem:[#allocation0]]
  $region42: #{lettuce_heads.1} parent=0
    _
  %s10 = ssub.s32 1, %s8
  %s11 = scalar_select 0, %s10, %s8
  $region1: #{lettuce_heads.1} parent=0
    #allocation2 [shape = 'u8[589824]{0}', space=vmem, size = 0x90000, scoped, tag = 'input window, operand 1, single buffered']
    #allocation3 [shape = 's32[1]{0}', space=sflag, size = 0x4, scoped, tag = 'scoped memory for lettuce_heads.1']
    %12 = vsyncpa [#allocation3], 0
    // Predicated region
    $region2: #{lettuce_heads.1} parent=1 // pred_check
      _
    $region3: #{lettuce_heads.1} parent=1 // pred_check_branch
      %14 = sbr.rel (0) target = $region5
    $region4: #{lettuce_heads.1} parent=1 // pred_region
      _
    $region5: #{lettuce_heads.1} parent=1 // pred_fallthru
      _
    // Predicated region
    $region6: #{lettuce_heads.1} parent=1 // pred_check
      _
    $region7: #{lettuce_heads.1} parent=1 // pred_check_branch
      %16 = sbr.rel (0) target = $region9
    $region8: #{lettuce_heads.1} parent=1 // pred_region
      %s18 = ssub.s32 18432, 18432
      %19 = vsyncadd [#allocation3], %s18
      %s20 = sshll.u32 [#allocation2], 4
      %s21 = int_to_ptr.vmem [resolvable:$true] %s20
      %26 = dma.hbm_to_vmem [thread:$0]  %s1, 18432, %s21, [#allocation3], 256, 256, 16
    $region9: #{lettuce_heads.1} parent=1 // pred_fallthru
      _
    // Predicated region
    $region10: #{lettuce_heads.1} parent=1 // pred_check
      _
    $region11: #{lettuce_heads.1} parent=1 // pred_check_branch
      %28 = sbr.rel (0) target = $region13
    $region12: #{lettuce_heads.1} parent=1 // pred_region
      _
    $region13: #{lettuce_heads.1} parent=1 // pred_fallthru
      _
    // Predicated region
    $region14: #{lettuce_heads.1} parent=1 // pred_check
      _
    $region15: #{lettuce_heads.1} parent=1 // pred_check_branch
      %30 = sbr.rel (0) target = $region17
    $region16: #{lettuce_heads.1} parent=1 // pred_region
      _
    $region17: #{lettuce_heads.1} parent=1 // pred_fallthru
      _
    // Predicated region
    $region18: #{lettuce_heads.1} parent=1 // pred_check
      _
    $region19: #{lettuce_heads.1} parent=1 // pred_check_branch
      %32 = sbr.rel (0) target = $region21
    $region20: #{lettuce_heads.1} parent=1 // pred_region
      _
    $region21: #{lettuce_heads.1} parent=1 // pred_fallthru
      _
    // Predicated region
    $region22: #{lettuce_heads.1} parent=1 // pred_check
      _
    $region23: #{lettuce_heads.1} parent=1 // pred_check_branch
      %34 = sbr.rel (0) target = $region25
    $region24: #{lettuce_heads.1} parent=1 // pred_region
      _
    $region25: #{lettuce_heads.1} parent=1 // pred_fallthru
      _
    // Predicated region
    $region26: #{lettuce_heads.1} parent=1 // pred_check
      _
    $region27: #{lettuce_heads.1} parent=1 // pred_check_branch
      %36 = sbr.rel (0) target = $region29
    $region28: #{lettuce_heads.1} parent=1 // pred_region
      _
    $region29: #{lettuce_heads.1} parent=1 // pred_fallthru
      _
    // Predicated region
    $region30: #{lettuce_heads.1} parent=1 // pred_check
      _
    $region31: #{lettuce_heads.1} parent=1 // pred_check_branch
      %38 = sbr.rel (0) target = $region33
    $region32: #{lettuce_heads.1} parent=1 // pred_region
      %39 = dma.done [#allocation3], 18432
    $region33: #{lettuce_heads.1} parent=1 // pred_fallthru
      _
    %v40 = vld [vmem:[%s0] sm:$0xff]
    %v41 = vld [vmem:[%s0 + $0x8] sm:$0xff]
    %v42 = vld [vmem:[%s0 + $0x10] sm:$0xff]
    %v43 = vld [vmem:[%s0 + $0x18] sm:$0xff]
    %v44 = vld [vmem:[%s0 + $0x20] sm:$0xff]
    %v45 = vld [vmem:[%s0 + $0x28] sm:$0xff]
    %v46 = vld [vmem:[%s0 + $0x30] sm:$0xff]
    %v47 = vld [vmem:[%s0 + $0x38] sm:$0xff]
    %v48 = vld [vmem:[%s0 + $0x40] sm:$0xff]
    %v49 = vld [vmem:[%s0 + $0x48] sm:$0xff]
    %v50 = vld [vmem:[%s0 + $0x50] sm:$0xff]
    %v51 = vld [vmem:[%s0 + $0x58] sm:$0xff]
    %v52 = vld [vmem:[%s0 + $0x60] sm:$0xff]
    %v53 = vld [vmem:[%s0 + $0x68] sm:$0xff]
    %v54 = vld [vmem:[%s0 + $0x70] sm:$0xff]
    %v55 = vld [vmem:[%s0 + $0x78] sm:$0xff]
    %v56 = vld [vmem:[%s0 + $0x80] sm:$0xff]
    %v57 = vld [vmem:[%s0 + $0x88] sm:$0xff]
    %v58 = vld [vmem:[%s0 + $0x90] sm:$0xff]
    %v59 = vld [vmem:[%s0 + $0x98] sm:$0xff]
    %v60 = vld [vmem:[%s0 + $0xa0] sm:$0xff]
    %v61 = vld [vmem:[%s0 + $0xa8] sm:$0xff]
    %v62 = vld [vmem:[%s0 + $0xb0] sm:$0xff]
    %v63 = vld [vmem:[%s0 + $0xb8] sm:$0xff]
    %v64 = vld [vmem:[%s0 + $0xc0] sm:$0xff]
    %v65 = vld [vmem:[%s0 + $0xc8] sm:$0xff]
    %v66 = vld [vmem:[%s0 + $0xd0] sm:$0xff]
    %v67 = vld [vmem:[%s0 + $0xd8] sm:$0xff]
    %v68 = vld [vmem:[%s0 + $0xe0] sm:$0xff]
    %v69 = vld [vmem:[%s0 + $0xe8] sm:$0xff]
    %v70 = vld [vmem:[%s0 + $0xf0] sm:$0x1]
    %v71 = vld [vmem:[%s0 + $0xf8] sm:$0x1]
    %v72 = vld [vmem:[%s0 + $0x100] sm:$0x1]
    %v73 = vld [vmem:[%s0 + $0x108] sm:$0x1]
    %v74 = vld [vmem:[%s0 + $0x110] sm:$0x1]
    %v75 = vld [vmem:[%s0 + $0x118] sm:$0xff]
    %v76 = vld [vmem:[%s0 + $0x120] sm:$0xff]
    %v77 = vld [vmem:[%s0 + $0x128] sm:$0xff]
    %v78 = vld [vmem:[%s0 + $0x130] sm:$0xff]
    %v79 = vld [vmem:[%s0 + $0x138] sm:$0xff]
    %v80 = vld [vmem:[%s0 + $0x140] sm:$0xff]
    %v81 = vld [vmem:[%s0 + $0x148] sm:$0xff]
    %v82 = vld [vmem:[%s0 + $0x150] sm:$0xff]
    %v83 = vld [vmem:[%s0 + $0x158] sm:$0xff]
    %v84 = vld [vmem:[%s0 + $0x160] sm:$0xff]
    %v85 = vld [vmem:[%s0 + $0x168] sm:$0xff]
    %v86 = vld [vmem:[%s0 + $0x170] sm:$0xff]
    %v87 = vld [vmem:[%s0 + $0x178] sm:$0xff]
    %v88 = vld [vmem:[%s0 + $0x180] sm:$0xff]
    %v89 = vld [vmem:[%s0 + $0x188] sm:$0xff]
    %v90 = vld [vmem:[%s0 + $0x190] sm:$0xff]
    %v91 = vld [vmem:[%s0 + $0x198] sm:$0xff]
    %v92 = vld [vmem:[%s0 + $0x1a0] sm:$0xff]
    %v93 = vld [vmem:[%s0 + $0x1a8] sm:$0xff]
    %v94 = vld [vmem:[%s0 + $0x1b0] sm:$0xff]
    %v95 = vld [vmem:[%s0 + $0x1b8] sm:$0xff]
    %v96 = vld [vmem:[%s0 + $0x1c0] sm:$0xff]
    %v97 = vld [vmem:[%s0 + $0x1c8] sm:$0xff]
    %v98 = vld [vmem:[%s0 + $0x1d0] sm:$0xff]
    %v99 = vld [vmem:[%s0 + $0x1d8] sm:$0xff]
    %v100 = vld [vmem:[%s0 + $0x1e0] sm:$0xff]
    %v101 = vld [vmem:[%s0 + $0x1e8] sm:$0xff]
    %v102 = vld [vmem:[%s0 + $0x1f0] sm:$0xff]
    %v103 = vld [vmem:[%s0 + $0x1f8] sm:$0xff]
    %v104 = vld [vmem:[%s0 + $0x200] sm:$0xff]
    %v105 = vld [vmem:[%s0 + $0x208] sm:$0x1]
    %v106 = vld [vmem:[%s0 + $0x210] sm:$0x1]
    %v107 = vld [vmem:[%s0 + $0x218] sm:$0x1]
    %v108 = vld [vmem:[%s0 + $0x220] sm:$0x1]
    %v109 = vld [vmem:[%s0 + $0x228] sm:$0x1]
    %v110 = vadd.f32 %v40, %v45
    %v111 = vadd.f32 %v110, %v50
    %v112 = vadd.f32 %v111, %v55
    %v113 = vadd.f32 %v112, %v60
    %v114 = vadd.f32 %v113, %v65
    %vm115 = vcmask 1040384
    %v116 = vsel %vm115, %v70, 0.0
    %v117 = vadd.f32 %v114, %v116
    %v118 = vrot.slane %v117, 4
    %v119 = vadd.f32 %v117, %v118
    %v120 = vrot.slane %v119, 2
    %v121 = vadd.f32 %v119, %v120
    %v122 = vrot.slane %v121, 1
    %v123 = vadd.f32 %v121, %v122
    %v124 = vadd.f32 %v41, %v46
    %v125 = vadd.f32 %v124, %v51
    %v126 = vadd.f32 %v125, %v56
    %v127 = vadd.f32 %v126, %v61
    %v128 = vadd.f32 %v127, %v66
    %v129 = vsel %vm115, %v71, 0.0
    %v130 = vadd.f32 %v128, %v129
    %v131 = vrot.slane %v130, 4
    %v132 = vadd.f32 %v130, %v131
    %v133 = vrot.slane %v132, 2
    %v134 = vadd.f32 %v132, %v133
    %v135 = vrot.slane %v134, 1
    %v136 = vadd.f32 %v134, %v135
    %v137 = vadd.f32 %v42, %v47
    %v138 = vadd.f32 %v137, %v52
    %v139 = vadd.f32 %v138, %v57
    %v140 = vadd.f32 %v139, %v62
    %v141 = vadd.f32 %v140, %v67
    %v142 = vsel %vm115, %v72, 0.0
    %v143 = vadd.f32 %v141, %v142
    %v144 = vrot.slane %v143, 4
    %v145 = vadd.f32 %v143, %v144
    %v146 = vrot.slane %v145, 2
    %v147 = vadd.f32 %v145, %v146
    %v148 = vrot.slane %v147, 1
    %v149 = vadd.f32 %v147, %v148
    %v150 = vadd.f32 %v43, %v48
    %v151 = vadd.f32 %v150, %v53
    %v152 = vadd.f32 %v151, %v58
    %v153 = vadd.f32 %v152, %v63
    %v154 = vadd.f32 %v153, %v68
    %v155 = vsel %vm115, %v73, 0.0
    %v156 = vadd.f32 %v154, %v155
    %v157 = vrot.slane %v156, 4
    %v158 = vadd.f32 %v156, %v157
    %v159 = vrot.slane %v158, 2
    %v160 = vadd.f32 %v158, %v159
    %v161 = vrot.slane %v160, 1
    %v162 = vadd.f32 %v160, %v161
    %vm163 = vcmask 523264
    %v164 = vsel %vm163, %v44, 0.0
    %v165 = vsel %vm163, %v49, 0.0
    %v166 = vadd.f32 %v164, %v165
    %v167 = vsel %vm163, %v54, 0.0
    %v168 = vadd.f32 %v166, %v167
    %v169 = vsel %vm163, %v59, 0.0
    %v170 = vadd.f32 %v168, %v169
    %v171 = vsel %vm163, %v64, 0.0
    %v172 = vadd.f32 %v170, %v171
    %v173 = vsel %vm163, %v69, 0.0
    %v174 = vadd.f32 %v172, %v173
    %vm175 = vcmask 516096
    %v176 = vsel %vm175, %v74, 0.0
    %v177 = vadd.f32 %v174, %v176
    %v178 = vrot.slane %v177, 4
    %v179 = vadd.f32 %v177, %v178
    %v180 = vrot.slane %v179, 2
    %v181 = vadd.f32 %v179, %v180
    %v182 = vrot.slane %v181, 1
    %v183 = vadd.f32 %v181, %v182
    %v184 = vadd.f32 %v75, %v80
    %v185 = vadd.f32 %v184, %v85
    %v186 = vadd.f32 %v185, %v90
    %v187 = vadd.f32 %v186, %v95
    %v188 = vadd.f32 %v187, %v100
    %v189 = vsel %vm115, %v105, 0.0
    %v190 = vadd.f32 %v188, %v189
    %v191 = vrot.slane %v190, 4
    %v192 = vadd.f32 %v190, %v191
    %v193 = vrot.slane %v192, 2
    %v194 = vadd.f32 %v192, %v193
    %v195 = vrot.slane %v194, 1
    %v196 = vadd.f32 %v194, %v195
    %v197 = vadd.f32 %v76, %v81
    %v198 = vadd.f32 %v197, %v86
    %v199 = vadd.f32 %v198, %v91
    %v200 = vadd.f32 %v199, %v96
    %v201 = vadd.f32 %v200, %v101
    %v202 = vsel %vm115, %v106, 0.0
    %v203 = vadd.f32 %v201, %v202
    %v204 = vrot.slane %v203, 4
    %v205 = vadd.f32 %v203, %v204
    %v206 = vrot.slane %v205, 2
    %v207 = vadd.f32 %v205, %v206
    %v208 = vrot.slane %v207, 1
    %v209 = vadd.f32 %v207, %v208
    %v210 = vadd.f32 %v77, %v82
    %v211 = vadd.f32 %v210, %v87
    %v212 = vadd.f32 %v211, %v92
    %v213 = vadd.f32 %v212, %v97
    %v214 = vadd.f32 %v213, %v102
    %v215 = vsel %vm115, %v107, 0.0
    %v216 = vadd.f32 %v214, %v215
    %v217 = vrot.slane %v216, 4
    %v218 = vadd.f32 %v216, %v217
    %v219 = vrot.slane %v218, 2
    %v220 = vadd.f32 %v218, %v219
    %v221 = vrot.slane %v220, 1
    %v222 = vadd.f32 %v220, %v221
    %v223 = vadd.f32 %v78, %v83
    %v224 = vadd.f32 %v223, %v88
    %v225 = vadd.f32 %v224, %v93
    %v226 = vadd.f32 %v225, %v98
    %v227 = vadd.f32 %v226, %v103
    %v228 = vsel %vm115, %v108, 0.0
    %v229 = vadd.f32 %v227, %v228
    %v230 = vrot.slane %v229, 4
    %v231 = vadd.f32 %v229, %v230
    %v232 = vrot.slane %v231, 2
    %v233 = vadd.f32 %v231, %v232
    %v234 = vrot.slane %v233, 1
    %v235 = vadd.f32 %v233, %v234
    %v236 = vsel %vm163, %v79, 0.0
    %v237 = vsel %vm163, %v84, 0.0
    %v238 = vadd.f32 %v236, %v237
    %v239 = vsel %vm163, %v89, 0.0
    %v240 = vadd.f32 %v238, %v239
    %v241 = vsel %vm163, %v94, 0.0
    %v242 = vadd.f32 %v240, %v241
    %v243 = vsel %vm163, %v99, 0.0
    %v244 = vadd.f32 %v242, %v243
    %v245 = vsel %vm163, %v104, 0.0
    %v246 = vadd.f32 %v244, %v245
    %v247 = vsel %vm175, %v109, 0.0
    %v248 = vadd.f32 %v246, %v247
    %v249 = vrot.slane %v248, 4
    %v250 = vadd.f32 %v248, %v249
    %v251 = vrot.slane %v250, 2
    %v252 = vadd.f32 %v250, %v251
    %v253 = vrot.slane %v252, 1
    %v254 = vadd.f32 %v252, %v253
    %v255 = vmul.f32 %v123, 0.020408163
    %v256 = vmul.f32 %v136, 0.020408163
    %v257 = vmul.f32 %v149, 0.020408163
    %v258 = vmul.f32 %v162, 0.020408163
    %v259 = vmul.f32 %v183, 0.020408163
    %v260 = vmul.f32 %v196, 0.020408163
    %v261 = vmul.f32 %v209, 0.020408163
    %v262 = vmul.f32 %v222, 0.020408163
    %v263 = vmul.f32 %v235, 0.020408163
    %v264 = vmul.f32 %v254, 0.020408163
    %v265 = vld [vmem:[#allocation2] sm:$0xff]
    %v266 = vld [vmem:[#allocation2 + $0x8] sm:$0xff]
    %v267 = vld [vmem:[#allocation2 + $0x10] sm:$0xff]
    %v268 = vld [vmem:[#allocation2 + $0x18] sm:$0xff]
    %v269 = vld [vmem:[#allocation2 + $0x20] sm:$0xff]
    %v270 = vld [vmem:[#allocation2 + $0x28] sm:$0xff]
    %v271 = vld [vmem:[#allocation2 + $0x30] sm:$0xff]
    %v272 = vld [vmem:[#allocation2 + $0x38] sm:$0xff]
    %v273 = vld [vmem:[#allocation2 + $0x40] sm:$0xff]
    %v274 = vld [vmem:[#allocation2 + $0x48] sm:$0xff]
    %v275 = vld [vmem:[#allocation2 + $0x50] sm:$0xff]
    %v276 = vld [vmem:[#allocation2 + $0x58] sm:$0xff]
    %v277 = vld [vmem:[#allocation2 + $0x60] sm:$0xff]
    %v278 = vld [vmem:[#allocation2 + $0x68] sm:$0xff]
    %v279 = vld [vmem:[#allocation2 + $0x70] sm:$0xff]
    %v280 = vld [vmem:[#allocation2 + $0x78] sm:$0xff]
    %v281 = vld [vmem:[#allocation2 + $0x80] sm:$0xff]
    %v282 = vld [vmem:[#allocation2 + $0x88] sm:$0xff]
    %v283 = vld [vmem:[#allocation2 + $0x90] sm:$0xff]
    %v284 = vld [vmem:[#allocation2 + $0x98] sm:$0xff]
    %v285 = vld [vmem:[#allocation2 + $0xa0] sm:$0xff]
    %v286 = vld [vmem:[#allocation2 + $0xa8] sm:$0xff]
    %v287 = vld [vmem:[#allocation2 + $0xb0] sm:$0xff]
    %v288 = vld [vmem:[#allocation2 + $0xb8] sm:$0xff]
    %v289 = vld [vmem:[#allocation2 + $0xc0] sm:$0xff]
    %v290 = vld [vmem:[#allocation2 + $0xc8] sm:$0xff]
    %v291 = vld [vmem:[#allocation2 + $0xd0] sm:$0xff]
    %v292 = vld [vmem:[#allocation2 + $0xd8] sm:$0xff]
    %v293 = vld [vmem:[#allocation2 + $0xe0] sm:$0xff]
    %v294 = vld [vmem:[#allocation2 + $0xe8] sm:$0xff]
    %v295 = vld [vmem:[#allocation2 + $0xf0] sm:$0xff]
    %v296 = vld [vmem:[#allocation2 + $0xf8] sm:$0xff]
    %v297 = vld [vmem:[#allocation2 + $0x100] sm:$0xff]
    %v298 = vld [vmem:[#allocation2 + $0x108] sm:$0xff]
    %v299 = vld [vmem:[#allocation2 + $0x110] sm:$0xff]
    %v300 = vld [vmem:[#allocation2 + $0x118] sm:$0xff]
    %v301 = vld [vmem:[#allocation2 + $0x120] sm:$0xff]
    %v302 = vld [vmem:[#allocation2 + $0x128] sm:$0xff]
    %v303 = vld [vmem:[#allocation2 + $0x130] sm:$0xff]
    %v304 = vld [vmem:[#allocation2 + $0x138] sm:$0xff]
    %v305 = vld [vmem:[#allocation2 + $0x140] sm:$0xff]
    %v306 = vld [vmem:[#allocation2 + $0x148] sm:$0xff]
    %v307 = vld [vmem:[#allocation2 + $0x150] sm:$0xff]
    %v308 = vld [vmem:[#allocation2 + $0x158] sm:$0xff]
    %v309 = vld [vmem:[#allocation2 + $0x160] sm:$0xff]
    %v310 = vld [vmem:[#allocation2 + $0x168] sm:$0xff]
    %v311 = vld [vmem:[#allocation2 + $0x170] sm:$0xff]
    %v312 = vld [vmem:[#allocation2 + $0x178] sm:$0xff]
    %v313 = vld [vmem:[#allocation2 + $0x180] sm:$0xff]
    %v314 = vld [vmem:[#allocation2 + $0x188] sm:$0xff]
    %v315 = vld [vmem:[#allocation2 + $0x190] sm:$0xff]
    %v316 = vld [vmem:[#allocation2 + $0x198] sm:$0xff]
    %v317 = vld [vmem:[#allocation2 + $0x1a0] sm:$0xff]
    %v318 = vld [vmem:[#allocation2 + $0x1a8] sm:$0xff]
    %v319 = vld [vmem:[#allocation2 + $0x1b0] sm:$0xff]
    %v320 = vld [vmem:[#allocation2 + $0x1b8] sm:$0xff]
    %v321 = vld [vmem:[#allocation2 + $0x1c0] sm:$0xff]
    %v322 = vld [vmem:[#allocation2 + $0x1c8] sm:$0xff]
    %v323 = vld [vmem:[#allocation2 + $0x1d0] sm:$0xff]
    %v324 = vld [vmem:[#allocation2 + $0x1d8] sm:$0xff]
    %v325 = vld [vmem:[#allocation2 + $0x1e0] sm:$0xff]
    %v326 = vld [vmem:[#allocation2 + $0x1e8] sm:$0xff]
    %v327 = vld [vmem:[#allocation2 + $0x1f0] sm:$0xff]
    %v328 = vld [vmem:[#allocation2 + $0x1f8] sm:$0xff]
    %v329 = vld [vmem:[#allocation2 + $0x200] sm:$0xff]
    %v330 = vld [vmem:[#allocation2 + $0x208] sm:$0xff]
    %v331 = vld [vmem:[#allocation2 + $0x210] sm:$0xff]
    %v332 = vld [vmem:[#allocation2 + $0x218] sm:$0xff]
    %v333 = vld [vmem:[#allocation2 + $0x220] sm:$0xff]
    %v334 = vld [vmem:[#allocation2 + $0x228] sm:$0xff]
    %v335 = vld [vmem:[#allocation2 + $0x230] sm:$0xff]
    %v336 = vld [vmem:[#allocation2 + $0x238] sm:$0xff]
    %v337 = vld [vmem:[#allocation2 + $0x240] sm:$0xff]
    %v338 = vld [vmem:[#allocation2 + $0x248] sm:$0xff]
    %v339 = vld [vmem:[#allocation2 + $0x250] sm:$0xff]
    %v340 = vld [vmem:[#allocation2 + $0x258] sm:$0xff]
    %v341 = vld [vmem:[#allocation2 + $0x260] sm:$0xff]
    %v342 = vld [vmem:[#allocation2 + $0x268] sm:$0xff]
    %v343 = vld [vmem:[#allocation2 + $0x270] sm:$0xff]
    %v344 = vld [vmem:[#allocation2 + $0x278] sm:$0xff]
    %v345 = vld [vmem:[#allocation2 + $0x280] sm:$0xff]
    %v346 = vld [vmem:[#allocation2 + $0x288] sm:$0xff]
    %v347 = vld [vmem:[#allocation2 + $0x290] sm:$0xff]
    %v348 = vld [vmem:[#allocation2 + $0x298] sm:$0xff]
    %v349 = vld [vmem:[#allocation2 + $0x2a0] sm:$0xff]
    %v350 = vld [vmem:[#allocation2 + $0x2a8] sm:$0xff]
    %v351 = vld [vmem:[#allocation2 + $0x2b0] sm:$0xff]
    %v352 = vld [vmem:[#allocation2 + $0x2b8] sm:$0xff]
    %v353 = vld [vmem:[#allocation2 + $0x2c0] sm:$0xff]
    %v354 = vld [vmem:[#allocation2 + $0x2c8] sm:$0xff]
    %v355 = vld [vmem:[#allocation2 + $0x2d0] sm:$0xff]
    %v356 = vld [vmem:[#allocation2 + $0x2d8] sm:$0xff]
    %v357 = vld [vmem:[#allocation2 + $0x2e0] sm:$0xff]
    %v358 = vld [vmem:[#allocation2 + $0x2e8] sm:$0xff]
    %v359 = vld [vmem:[#allocation2 + $0x2f0] sm:$0xff]
    %v360 = vld [vmem:[#allocation2 + $0x2f8] sm:$0xff]
    %v361 = vld [vmem:[#allocation2 + $0x300] sm:$0xff]
    %v362 = vld [vmem:[#allocation2 + $0x308] sm:$0xff]
    %v363 = vld [vmem:[#allocation2 + $0x310] sm:$0xff]
    %v364 = vld [vmem:[#allocation2 + $0x318] sm:$0xff]
    %v365 = vld [vmem:[#allocation2 + $0x320] sm:$0xff]
    %v366 = vld [vmem:[#allocation2 + $0x328] sm:$0xff]
    %v367 = vld [vmem:[#allocation2 + $0x330] sm:$0xff]
    %v368 = vld [vmem:[#allocation2 + $0x338] sm:$0xff]
    %v369 = vld [vmem:[#allocation2 + $0x340] sm:$0xff]
    %v370 = vld [vmem:[#allocation2 + $0x348] sm:$0xff]
    %v371 = vld [vmem:[#allocation2 + $0x350] sm:$0xff]
    %v372 = vld [vmem:[#allocation2 + $0x358] sm:$0xff]
    %v373 = vld [vmem:[#allocation2 + $0x360] sm:$0xff]
    %v374 = vld [vmem:[#allocation2 + $0x368] sm:$0xff]
    %v375 = vld [vmem:[#allocation2 + $0x370] sm:$0xff]
    %v376 = vld [vmem:[#allocation2 + $0x378] sm:$0xff]
    %v377 = vld [vmem:[#allocation2 + $0x380] sm:$0xff]
    %v378 = vld [vmem:[#allocation2 + $0x388] sm:$0xff]
    %v379 = vld [vmem:[#allocation2 + $0x390] sm:$0xff]
    %v380 = vld [vmem:[#allocation2 + $0x398] sm:$0xff]
    %v381 = vld [vmem:[#allocation2 + $0x3a0] sm:$0xff]
    %v382 = vld [vmem:[#allocation2 + $0x3a8] sm:$0xff]
    %v383 = vld [vmem:[#allocation2 + $0x3b0] sm:$0xff]
    %v384 = vld [vmem:[#allocation2 + $0x3b8] sm:$0xff]
    %v385 = vld [vmem:[#allocation2 + $0x3c0] sm:$0xff]
    %v386 = vld [vmem:[#allocation2 + $0x3c8] sm:$0xff]
    %v387 = vld [vmem:[#allocation2 + $0x3d0] sm:$0xff]
    %v388 = vld [vmem:[#allocation2 + $0x3d8] sm:$0xff]
    %v389 = vld [vmem:[#allocation2 + $0x3e0] sm:$0xff]
    %v390 = vld [vmem:[#allocation2 + $0x3e8] sm:$0xff]
    %v391 = vld [vmem:[#allocation2 + $0x3f0] sm:$0xff]
    %v392 = vld [vmem:[#allocation2 + $0x3f8] sm:$0xff]
    %v393 = vld [vmem:[#allocation2 + $0x400] sm:$0xff]
    %v394 = vld [vmem:[#allocation2 + $0x408] sm:$0xff]
    %v395 = vld [vmem:[#allocation2 + $0x410] sm:$0xff]
    %v396 = vld [vmem:[#allocation2 + $0x418] sm:$0xff]
    %v397 = vld [vmem:[#allocation2 + $0x420] sm:$0xff]
    %v398 = vld [vmem:[#allocation2 + $0x428] sm:$0xff]
    %v399 = vld [vmem:[#allocation2 + $0x430] sm:$0xff]
    %v400 = vld [vmem:[#allocation2 + $0x438] sm:$0xff]
    %v401 = vld [vmem:[#allocation2 + $0x440] sm:$0xff]
    %v402 = vld [vmem:[#allocation2 + $0x448] sm:$0xff]
    %v403 = vld [vmem:[#allocation2 + $0x450] sm:$0xff]
    %v404 = vld [vmem:[#allocation2 + $0x458] sm:$0xff]
    %v405 = vld [vmem:[#allocation2 + $0x460] sm:$0xff]
    %v406 = vld [vmem:[#allocation2 + $0x468] sm:$0xff]
    %v407 = vld [vmem:[#allocation2 + $0x470] sm:$0xff]
    %v408 = vld [vmem:[#allocation2 + $0x478] sm:$0xff]
    %v409 = vld [vmem:[%s2] sm:$0x3]
    %v411 = vlaneseq
    %v412 = vshrl.u32 %v411, 7
    %v413 = vsub.s32 0, %v412
    %v414 = vrot.slane %v409, %v413
    %v415 = vlaneseq
    %v416 = vshrl.u32 %v415, 7
    %v417 = vsub.s32 1, %v416
    %v418 = vrot.slane %v409, %v417
    %vm431 = vcmask 1041409
    %v432 = vsel %vm431, %v260, %v255
    %v433 = vsel %vm431, %v261, %v256
    %v434 = vsel %vm431, %v262, %v257
    %v435 = vsel %vm431, %v263, %v258
    %v436 = vsel %vm431, %v264, %v259
    %v441 = vsel %vm163, %v436, 0
    %443 = vmatprep.subr.mxu0 %v266
    %444 = vmatpush1.msra.mxu0 %v265
    %445 = vmatprep.subr.mxu0 %v268
    %446 = vmatpush1.msra.mxu0 %v267
    %447 = vmatprep.subr.mxu0 %v270
    %448 = vmatpush1.msra.mxu0 %v269
    %449 = vmatprep.subr.mxu0 %v272
    %450 = vmatpush1.msra.mxu0 %v271
    %451 = vmatprep.subr.mxu0 %v274
    %452 = vmatpush1.msra.mxu0 %v273
    %453 = vmatprep.subr.mxu0 %v276
    %454 = vmatpush1.msra.mxu0 %v275
    %455 = vmatprep.subr.mxu0 %v278
    %456 = vmatpush1.msra.mxu0 %v277
    %457 = vmatprep.subr.mxu0 %v280
    %458 = vmatpush1.msra.mxu0 %v279
    %459 = vmatprep.subr.mxu0 %v282
    %460 = vmatpush1.msra.mxu0 %v281
    %461 = vmatprep.subr.mxu0 %v284
    %462 = vmatpush1.msra.mxu0 %v283
    %463 = vmatprep.subr.mxu0 %v286
    %464 = vmatpush1.msra.mxu0 %v285
    %465 = vmatprep.subr.mxu0 %v288
    %466 = vmatpush1.msra.mxu0 %v287
    %467 = vmatprep.subr.mxu0 %v290
    %468 = vmatpush1.msra.mxu0 %v289
    %469 = vmatprep.subr.mxu0 %v292
    %470 = vmatpush1.msra.mxu0 %v291
    %471 = vmatprep.subr.mxu0 %v294
    %472 = vmatpush1.msra.mxu0 %v293
    %473 = vmatprep.subr.mxu0 %v296
    %474 = vmatpush1.msra.mxu0 %v295
    %475 = vmatprep.subr.mxu0 %v298
    %476 = vmatpush1.msra.mxu0 %v297
    %477 = vmatprep.subr.mxu0 %v300
    %478 = vmatpush1.msra.mxu0 %v299
    %479 = vmatprep.subr.mxu0 %v302
    %480 = vmatpush1.msra.mxu0 %v301
    %481 = vmatprep.subr.mxu0 %v304
    %482 = vmatpush1.msra.mxu0 %v303
    %483 = vmatprep.subr.mxu0 %v306
    %484 = vmatpush1.msra.mxu0 %v305
    %485 = vmatprep.subr.mxu0 %v308
    %486 = vmatpush1.msra.mxu0 %v307
    %487 = vmatprep.subr.mxu0 %v310
    %488 = vmatpush1.msra.mxu0 %v309
    %489 = vmatprep.subr.mxu0 %v312
    %490 = vmatpush1.msra.mxu0 %v311
    %491 = vmatprep.subr.mxu0 %v314
    %492 = vmatpush1.msra.mxu0 %v313
    %493 = vmatprep.subr.mxu0 %v316
    %494 = vmatpush1.msra.mxu0 %v315
    %495 = vmatprep.subr.mxu0 %v318
    %496 = vmatpush1.msra.mxu0 %v317
    %497 = vmatprep.subr.mxu0 %v320
    %498 = vmatpush1.msra.mxu0 %v319
    %499 = vmatprep.subr.mxu0 %v322
    %500 = vmatpush1.msra.mxu0 %v321
    %501 = vmatprep.subr.mxu0 %v324
    %502 = vmatpush1.msra.mxu0 %v323
    %503 = vmatprep.subr.mxu0 %v326
    %504 = vmatpush1.msra.mxu0 %v325
    %505 = vmatprep.subr.mxu0 %v328
    %506 = vmatpush1.msra.mxu0 %v327
    %507 = vmatprep.mubr.f32.mxu0 %v433
    %508 = vmatmul.mubr.f32.gmra.mrb[0].mxu0 %v432
    %v509 = vpop.f32.mrb[0].mxu0
    %v510 = vadd.f32 %v414, %v509
    %v511 = vpop.f32.mrb[0].mxu0
    %v512 = vadd.f32 %v418, %v511
    %513 = vdwg.mxu0
    %514 = vmatprep.subr.mxu0 %v330
    %515 = vmatpush1.msra.mxu0 %v329
    %516 = vmatprep.subr.mxu0 %v332
    %517 = vmatpush1.msra.mxu0 %v331
    %518 = vmatprep.subr.mxu0 %v334
    %519 = vmatpush1.msra.mxu0 %v333
    %520 = vmatprep.subr.mxu0 %v336
    %521 = vmatpush1.msra.mxu0 %v335
    %522 = vmatprep.subr.mxu0 %v338
    %523 = vmatpush1.msra.mxu0 %v337
    %524 = vmatprep.subr.mxu0 %v340
    %525 = vmatpush1.msra.mxu0 %v339
    %526 = vmatprep.subr.mxu0 %v342
    %527 = vmatpush1.msra.mxu0 %v341
    %528 = vmatprep.subr.mxu0 %v344
    %529 = vmatpush1.msra.mxu0 %v343
    %530 = vmatprep.subr.mxu0 %v346
    %531 = vmatpush1.msra.mxu0 %v345
    %532 = vmatprep.subr.mxu0 %v348
    %533 = vmatpush1.msra.mxu0 %v347
    %534 = vmatprep.subr.mxu0 %v350
    %535 = vmatpush1.msra.mxu0 %v349
    %536 = vmatprep.subr.mxu0 %v352
    %537 = vmatpush1.msra.mxu0 %v351
    %538 = vmatprep.subr.mxu0 %v354
    %539 = vmatpush1.msra.mxu0 %v353
    %540 = vmatprep.subr.mxu0 %v356
    %541 = vmatpush1.msra.mxu0 %v355
    %542 = vmatprep.subr.mxu0 %v358
    %543 = vmatpush1.msra.mxu0 %v357
    %544 = vmatprep.subr.mxu0 %v360
    %545 = vmatpush1.msra.mxu0 %v359
    %546 = vmatprep.subr.mxu0 %v362
    %547 = vmatpush1.msra.mxu0 %v361
    %548 = vmatprep.subr.mxu0 %v364
    %549 = vmatpush1.msra.mxu0 %v363
    %550 = vmatprep.subr.mxu0 %v366
    %551 = vmatpush1.msra.mxu0 %v365
    %552 = vmatprep.subr.mxu0 %v368
    %553 = vmatpush1.msra.mxu0 %v367
    %554 = vmatprep.subr.mxu0 %v370
    %555 = vmatpush1.msra.mxu0 %v369
    %556 = vmatprep.subr.mxu0 %v372
    %557 = vmatpush1.msra.mxu0 %v371
    %558 = vmatprep.subr.mxu0 %v374
    %559 = vmatpush1.msra.mxu0 %v373
    %560 = vmatprep.subr.mxu0 %v376
    %561 = vmatpush1.msra.mxu0 %v375
    %562 = vmatprep.subr.mxu0 %v378
    %563 = vmatpush1.msra.mxu0 %v377
    %564 = vmatprep.subr.mxu0 %v380
    %565 = vmatpush1.msra.mxu0 %v379
    %566 = vmatprep.subr.mxu0 %v382
    %567 = vmatpush1.msra.mxu0 %v381
    %568 = vmatprep.subr.mxu0 %v384
    %569 = vmatpush1.msra.mxu0 %v383
    %570 = vmatprep.subr.mxu0 %v386
    %571 = vmatpush1.msra.mxu0 %v385
    %572 = vmatprep.subr.mxu0 %v388
    %573 = vmatpush1.msra.mxu0 %v387
    %574 = vmatprep.subr.mxu0 %v390
    %575 = vmatpush1.msra.mxu0 %v389
    %576 = vmatprep.subr.mxu0 %v392
    %577 = vmatpush1.msra.mxu0 %v391
    %578 = vmatprep.mubr.f32.mxu0 %v435
    %579 = vmatmul.mubr.f32.gmra.mrb[0].mxu0 %v434
    %v580 = vpop.f32.mrb[0].mxu0
    %v581 = vadd.f32 %v510, %v580
    %v582 = vpop.f32.mrb[0].mxu0
    %v583 = vadd.f32 %v512, %v582
    %584 = vdwg.mxu0
    %585 = vmatprep.subr.mxu0 %v394
    %586 = vmatpush1.msra.mxu0 %v393
    %587 = vmatprep.subr.mxu0 %v396
    %588 = vmatpush1.msra.mxu0 %v395
    %589 = vmatprep.subr.mxu0 %v398
    %590 = vmatpush1.msra.mxu0 %v397
    %591 = vmatprep.subr.mxu0 %v400
    %592 = vmatpush1.msra.mxu0 %v399
    %593 = vmatprep.subr.mxu0 %v402
    %594 = vmatpush1.msra.mxu0 %v401
    %595 = vmatprep.subr.mxu0 %v404
    %596 = vmatpush1.msra.mxu0 %v403
    %597 = vmatprep.subr.mxu0 %v406
    %598 = vmatpush1.msra.mxu0 %v405
    %599 = vmatprep.subr.mxu0 %v408
    %600 = vmatpush1.msra.mxu0 %v407
    %601 = vmatprep.subr.mxu0 0.0
    %602 = vmatpush1.msra.mxu0 0.0
    %603 = vmatprep.subr.mxu0 0.0
    %604 = vmatpush1.msra.mxu0 0.0
    %605 = vmatprep.subr.mxu0 0.0
    %606 = vmatpush1.msra.mxu0 0.0
    %607 = vmatprep.subr.mxu0 0.0
    %608 = vmatpush1.msra.mxu0 0.0
    %609 = vmatprep.subr.mxu0 0.0
    %610 = vmatpush1.msra.mxu0 0.0
    %611 = vmatprep.subr.mxu0 0.0
    %612 = vmatpush1.msra.mxu0 0.0
    %613 = vmatprep.subr.mxu0 0.0
    %614 = vmatpush1.msra.mxu0 0.0
    %615 = vmatprep.subr.mxu0 0.0
    %616 = vmatpush1.msra.mxu0 0.0
    %617 = vmatprep.subr.mxu0 0.0
    %618 = vmatpush1.msra.mxu0 0.0
    %619 = vmatprep.subr.mxu0 0.0
    %620 = vmatpush1.msra.mxu0 0.0
    %621 = vmatprep.subr.mxu0 0.0
    %622 = vmatpush1.msra.mxu0 0.0
    %623 = vmatprep.subr.mxu0 0.0
    %624 = vmatpush1.msra.mxu0 0.0
    %625 = vmatprep.subr.mxu0 0.0
    %626 = vmatpush1.msra.mxu0 0.0
    %627 = vmatprep.subr.mxu0 0.0
    %628 = vmatpush1.msra.mxu0 0.0
    %629 = vmatprep.subr.mxu0 0.0
    %630 = vmatpush1.msra.mxu0 0.0
    %631 = vmatprep.subr.mxu0 0.0
    %632 = vmatpush1.msra.mxu0 0.0
    %633 = vmatprep.subr.mxu0 0.0
    %634 = vmatpush1.msra.mxu0 0.0
    %635 = vmatprep.subr.mxu0 0.0
    %636 = vmatpush1.msra.mxu0 0.0
    %637 = vmatprep.subr.mxu0 0.0
    %638 = vmatpush1.msra.mxu0 0.0
    %639 = vmatprep.subr.mxu0 0.0
    %640 = vmatpush1.msra.mxu0 0.0
    %641 = vmatprep.subr.mxu0 0.0
    %642 = vmatpush1.msra.mxu0 0.0
    %643 = vmatprep.subr.mxu0 0.0
    %644 = vmatpush1.msra.mxu0 0.0
    %645 = vmatprep.subr.mxu0 0.0
    %646 = vmatpush1.msra.mxu0 0.0
    %647 = vmatprep.subr.mxu0 0.0
    %648 = vmatpush1.msra.mxu0 0.0
    %649 = vmatprep.mubr.f32.mxu0 0.0
    %650 = vmatmul.mubr.f32.gmra.mrb[0].mxu0 %v441
    %v651 = vpop.f32.mrb[0].mxu0
    %v652 = vadd.f32 %v581, %v651
    %v653 = vpop.f32.mrb[0].mxu0
    %v654 = vadd.f32 %v583, %v653
    %655 = vdwg.mxu0
    %v656 = vadd.f32 %v652, 3.0
    %v657 = vadd.f32 %v654, 3.0
    %v658 = vmax.f32 %v656, 0.0
    %v659 = vmax.f32 %v657, 0.0
    %v660 = vmin.f32 %v658, 6.0
    %v661 = vmin.f32 %v659, 6.0
    %v662 = vmul.f32 %v652, %v660
    %v663 = vmul.f32 %v654, %v661
    %v664 = vmul.f32 %v662, 0.16666667
    %v665 = vmul.f32 %v663, 0.16666667
    %v666 = vld [vmem:[%s3] sm:$0xff]
    %v667 = vld [vmem:[%s3 + $0x8] sm:$0xff]
    %v668 = vld [vmem:[%s3 + $0x10] sm:$0xff]
    %v669 = vld [vmem:[%s3 + $0x18] sm:$0xff]
    %v670 = vld [vmem:[%s3 + $0x20] sm:$0xff]
    %v671 = vld [vmem:[%s3 + $0x28] sm:$0xff]
    %v672 = vld [vmem:[%s3 + $0x30] sm:$0xff]
    %v673 = vld [vmem:[%s3 + $0x38] sm:$0xff]
    %v674 = vld [vmem:[%s3 + $0x40] sm:$0xff]
    %v675 = vld [vmem:[%s3 + $0x48] sm:$0xff]
    %v676 = vld [vmem:[%s3 + $0x50] sm:$0xff]
    %v677 = vld [vmem:[%s3 + $0x58] sm:$0xff]
    %v678 = vld [vmem:[%s3 + $0x60] sm:$0xff]
    %v679 = vld [vmem:[%s3 + $0x68] sm:$0xff]
    %v680 = vld [vmem:[%s3 + $0x70] sm:$0xff]
    %v681 = vld [vmem:[%s3 + $0x78] sm:$0xff]
    %v682 = vld [vmem:[%s3 + $0x80] sm:$0xff]
    %v683 = vld [vmem:[%s3 + $0x88] sm:$0xff]
    %v684 = vld [vmem:[%s3 + $0x90] sm:$0xff]
    %v685 = vld [vmem:[%s3 + $0x98] sm:$0xff]
    %v686 = vld [vmem:[%s3 + $0xa0] sm:$0xff]
    %v687 = vld [vmem:[%s3 + $0xa8] sm:$0xff]
    %v688 = vld [vmem:[%s3 + $0xb0] sm:$0xff]
    %v689 = vld [vmem:[%s3 + $0xb8] sm:$0xff]
    %v690 = vld [vmem:[%s3 + $0xc0] sm:$0xff]
    %v691 = vld [vmem:[%s3 + $0xc8] sm:$0xff]
    %v692 = vld [vmem:[%s3 + $0xd0] sm:$0xff]
    %v693 = vld [vmem:[%s3 + $0xd8] sm:$0xff]
    %v694 = vld [vmem:[%s3 + $0xe0] sm:$0xff]
    %v695 = vld [vmem:[%s3 + $0xe8] sm:$0xff]
    %v696 = vld [vmem:[%s3 + $0xf0] sm:$0xff]
    %v697 = vld [vmem:[%s3 + $0xf8] sm:$0xff]
    %v698 = vld [vmem:[%s4] sm:$0x1]
    %v700 = vlaneseq
    %v701 = vshrl.u32 %v700, 7
    %v702 = vsub.s32 0, %v701
    %v703 = vrot.slane %v698, %v702
    %705 = vmatprep.subr.mxu0 0.0
    %706 = vmatpush1.msra.mxu0 %v666
    %707 = vmatprep.subr.mxu0 0.0
    %708 = vmatpush1.msra.mxu0 %v667
    %709 = vmatprep.subr.mxu0 0.0
    %710 = vmatpush1.msra.mxu0 %v668
    %711 = vmatprep.subr.mxu0 0.0
    %712 = vmatpush1.msra.mxu0 %v669
    %713 = vmatprep.subr.mxu0 0.0
    %714 = vmatpush1.msra.mxu0 %v670
    %715 = vmatprep.subr.mxu0 0.0
    %716 = vmatpush1.msra.mxu0 %v671
    %717 = vmatprep.subr.mxu0 0.0
    %718 = vmatpush1.msra.mxu0 %v672
    %719 = vmatprep.subr.mxu0 0.0
    %720 = vmatpush1.msra.mxu0 %v673
    %721 = vmatprep.subr.mxu0 0.0
    %722 = vmatpush1.msra.mxu0 %v674
    %723 = vmatprep.subr.mxu0 0.0
    %724 = vmatpush1.msra.mxu0 %v675
    %725 = vmatprep.subr.mxu0 0.0
    %726 = vmatpush1.msra.mxu0 %v676
    %727 = vmatprep.subr.mxu0 0.0
    %728 = vmatpush1.msra.mxu0 %v677
    %729 = vmatprep.subr.mxu0 0.0
    %730 = vmatpush1.msra.mxu0 %v678
    %731 = vmatprep.subr.mxu0 0.0
    %732 = vmatpush1.msra.mxu0 %v679
    %733 = vmatprep.subr.mxu0 0.0
    %734 = vmatpush1.msra.mxu0 %v680
    %735 = vmatprep.subr.mxu0 0.0
    %736 = vmatpush1.msra.mxu0 %v681
    %737 = vmatprep.subr.mxu0 0.0
    %738 = vmatpush1.msra.mxu0 %v682
    %739 = vmatprep.subr.mxu0 0.0
    %740 = vmatpush1.msra.mxu0 %v683
    %741 = vmatprep.subr.mxu0 0.0
    %742 = vmatpush1.msra.mxu0 %v684
    %743 = vmatprep.subr.mxu0 0.0
    %744 = vmatpush1.msra.mxu0 %v685
    %745 = vmatprep.subr.mxu0 0.0
    %746 = vmatpush1.msra.mxu0 %v686
    %747 = vmatprep.subr.mxu0 0.0
    %748 = vmatpush1.msra.mxu0 %v687
    %749 = vmatprep.subr.mxu0 0.0
    %750 = vmatpush1.msra.mxu0 %v688
    %751 = vmatprep.subr.mxu0 0.0
    %752 = vmatpush1.msra.mxu0 %v689
    %753 = vmatprep.subr.mxu0 0.0
    %754 = vmatpush1.msra.mxu0 %v690
    %755 = vmatprep.subr.mxu0 0.0
    %756 = vmatpush1.msra.mxu0 %v691
    %757 = vmatprep.subr.mxu0 0.0
    %758 = vmatpush1.msra.mxu0 %v692
    %759 = vmatprep.subr.mxu0 0.0
    %760 = vmatpush1.msra.mxu0 %v693
    %761 = vmatprep.subr.mxu0 0.0
    %762 = vmatpush1.msra.mxu0 %v694
    %763 = vmatprep.subr.mxu0 0.0
    %764 = vmatpush1.msra.mxu0 %v695
    %765 = vmatprep.subr.mxu0 0.0
    %766 = vmatpush1.msra.mxu0 %v696
    %767 = vmatprep.subr.mxu0 0.0
    %768 = vmatpush1.msra.mxu0 %v697
    %769 = vmatprep.mubr.f32.mxu0 %v665
    %770 = vmatmul.mubr.f32.gmra.mrb[0].mxu0 %v664
    %v771 = vpop.f32.mrb[0].mxu0
    %v772 = vadd.f32 %v703, %v771
    %v773 = vpop.f32.mrb[0].mxu0
    %774 = vdwg.mxu0
    %v775 = vadd.f32 %v772, 3.0
    %v776 = vmax.f32 %v775, 0.0
    %v777 = vmin.f32 %v776, 6.0
    %v778 = vmul.f32 %v772, %v777
    %v779 = vmul.f32 %v778, 0.16666667
    %v780 = vld [vmem:[%s5] sm:$0xff]
    %v781 = vld [vmem:[%s5 + $0x8] sm:$0xff]
    %v782 = vld [vmem:[%s5 + $0x10] sm:$0xff]
    %v783 = vld [vmem:[%s5 + $0x18] sm:$0xff]
    %v784 = vld [vmem:[%s5 + $0x20] sm:$0xff]
    %v785 = vld [vmem:[%s5 + $0x28] sm:$0xff]
    %v786 = vld [vmem:[%s5 + $0x30] sm:$0xff]
    %v787 = vld [vmem:[%s5 + $0x38] sm:$0xff]
    %v788 = vld [vmem:[%s5 + $0x40] sm:$0xff]
    %v789 = vld [vmem:[%s5 + $0x48] sm:$0xff]
    %v790 = vld [vmem:[%s5 + $0x50] sm:$0xff]
    %v791 = vld [vmem:[%s5 + $0x58] sm:$0xff]
    %v792 = vld [vmem:[%s5 + $0x60] sm:$0xff]
    %v793 = vld [vmem:[%s5 + $0x68] sm:$0xff]
    %v794 = vld [vmem:[%s5 + $0x70] sm:$0xff]
    %v795 = vld [vmem:[%s5 + $0x78] sm:$0xff]
    %v796 = vld [vmem:[%s6] sm:$0x1]
    %v798 = vlaneseq
    %v799 = vshrl.u32 %v798, 7
    %v800 = vsub.s32 0, %v799
    %v801 = vrot.slane %v796, %v800
    %803 = vmatprep.subr.mxu0 0.0
    %804 = vmatpush1.msra.mxu0 %v780
    %805 = vmatprep.subr.mxu0 0.0
    %806 = vmatpush1.msra.mxu0 %v781
    %807 = vmatprep.subr.mxu0 0.0
    %808 = vmatpush1.msra.mxu0 %v782
    %809 = vmatprep.subr.mxu0 0.0
    %810 = vmatpush1.msra.mxu0 %v783
    %811 = vmatprep.subr.mxu0 0.0
    %812 = vmatpush1.msra.mxu0 %v784
    %813 = vmatprep.subr.mxu0 0.0
    %814 = vmatpush1.msra.mxu0 %v785
    %815 = vmatprep.subr.mxu0 0.0
    %816 = vmatpush1.msra.mxu0 %v786
    %817 = vmatprep.subr.mxu0 0.0
    %818 = vmatpush1.msra.mxu0 %v787
    %819 = vmatprep.subr.mxu0 0.0
    %820 = vmatpush1.msra.mxu0 %v788
    %821 = vmatprep.subr.mxu0 0.0
    %822 = vmatpush1.msra.mxu0 %v789
    %823 = vmatprep.subr.mxu0 0.0
    %824 = vmatpush1.msra.mxu0 %v790
    %825 = vmatprep.subr.mxu0 0.0
    %826 = vmatpush1.msra.mxu0 %v791
    %827 = vmatprep.subr.mxu0 0.0
    %828 = vmatpush1.msra.mxu0 %v792
    %829 = vmatprep.subr.mxu0 0.0
    %830 = vmatpush1.msra.mxu0 %v793
    %831 = vmatprep.subr.mxu0 0.0
    %832 = vmatpush1.msra.mxu0 %v794
    %833 = vmatprep.subr.mxu0 0.0
    %834 = vmatpush1.msra.mxu0 %v795
    %835 = vmatprep.subr.mxu0 0.0
    %836 = vmatpush1.msra.mxu0 0.0
    %837 = vmatprep.subr.mxu0 0.0
    %838 = vmatpush1.msra.mxu0 0.0
    %839 = vmatprep.subr.mxu0 0.0
    %840 = vmatpush1.msra.mxu0 0.0
    %841 = vmatprep.subr.mxu0 0.0
    %842 = vmatpush1.msra.mxu0 0.0
    %843 = vmatprep.subr.mxu0 0.0
    %844 = vmatpush1.msra.mxu0 0.0
    %845 = vmatprep.subr.mxu0 0.0
    %846 = vmatpush1.msra.mxu0 0.0
    %847 = vmatprep.subr.mxu0 0.0
    %848 = vmatpush1.msra.mxu0 0.0
    %849 = vmatprep.subr.mxu0 0.0
    %850 = vmatpush1.msra.mxu0 0.0
    %851 = vmatprep.subr.mxu0 0.0
    %852 = vmatpush1.msra.mxu0 0.0
    %853 = vmatprep.subr.mxu0 0.0
    %854 = vmatpush1.msra.mxu0 0.0
    %855 = vmatprep.subr.mxu0 0.0
    %856 = vmatpush1.msra.mxu0 0.0
    %857 = vmatprep.subr.mxu0 0.0
    %858 = vmatpush1.msra.mxu0 0.0
    %859 = vmatprep.subr.mxu0 0.0
    %860 = vmatpush1.msra.mxu0 0.0
    %861 = vmatprep.subr.mxu0 0.0
    %862 = vmatpush1.msra.mxu0 0.0
    %863 = vmatprep.subr.mxu0 0.0
    %864 = vmatpush1.msra.mxu0 0.0
    %865 = vmatprep.subr.mxu0 0.0
    %866 = vmatpush1.msra.mxu0 0.0
    %867 = vmatprep.mubr.f32.mxu0 0.0
    %868 = vmatmul.mubr.f32.gmra.mrb[0].mxu0 %v779
    %v869 = vpop.f32.mrb[0].mxu0
    %v870 = vadd.f32 %v801, %v869
    %v871 = vpop.f32.mrb[0].mxu0
    %872 = vdwg.mxu0
    %v873 = vlaneseq
    %v874 = vand.u32 %v873, 127
    %vm875 = vcmp.eq.s32.totalorder %v874, 6
    %v876 = vxor.u32 %v870, 2147483648
    %v877 = vmul.f32 %v876, 1.442695
    %v878 = vpow.pop %v877
    %v879 = vadd.f32 %v878, 1.0
    %v880 = vrcp.pop %v879
    %v881 = vmul.f32 1.0, %v880
    %v882 = vsel %vm875, %v881, %v870
    %883 = vst [vmem:[%s7] sm:$0x3] %v882
    // Predicated region
    $region34: #{lettuce_heads.1} parent=1 // pred_check
      _
    $region35: #{lettuce_heads.1} parent=1 // pred_check_branch
      %885 = sbr.rel (0) target = $region37
    $region36: #{lettuce_heads.1} parent=1 // pred_region
      _
    $region37: #{lettuce_heads.1} parent=1 // pred_fallthru
      _
    // Predicated region
    $region38: #{lettuce_heads.1} parent=1 // pred_check
      _
    $region39: #{lettuce_heads.1} parent=1 // pred_check_branch
      %887 = sbr.rel (0) target = $region41
    $region40: #{lettuce_heads.1} parent=1 // pred_region
      _
    $region41: #{lettuce_heads.1} parent=1 // pred_fallthru
      _
    %888 = vsyncpa [#allocation3], 1

</llo_original>
